<compile_context>
chip_gen: v5e
topology: v5e:2x2
jax: 0.10.0
libtpu: 0.0.40
codegen_flags: <defaults>
</compile_context>

<pallas_src>
import jax
import jax.numpy as jnp
from jax.experimental import pallas as pl
from jax.experimental.pallas import tpu as pltpu

_LANE = 128
_ROW_ALIGN = 16  # bf16 packs 16 rows per vreg sublane group


def _round_up(n: int, m: int) -> int:
    return ((n + m - 1) // m) * m


def _cdiv(a: int, b: int) -> int:
    return (a + b - 1) // b


def _pad2d(a, rows, cols, dtype):
    """Zero-pad a 2-D array to (rows, cols) and cast to dtype."""
    out = jnp.zeros((rows, cols), dtype)
    return out.at[: a.shape[0], : a.shape[1]].set(a.astype(dtype))


def _fused_mlp2_kernel(sel_ref, x_ref, w1_ref, b1_ref, w2_ref, b2_ref, o_ref):
    """relu(relu(x @ W1 + b1) @ W2 + b2) for one row tile.

    x_ref : (TILE_N, D_pad)       bf16   (D_pad = full array width, not 128-padded)
    w1_ref: (2, D_pad, E_pad)     bf16   both streams resident; [0]=node, [1]=edge
    b1_ref: (2, 1, E_pad)         f32
    w2_ref: (2, E_pad, E_pad)     bf16
    b2_ref: (2, 1, E_pad)         f32
    o_ref : (TILE_N, E_pad)       bf16   (E_pad multiple of 128 -> unmasked stores)
    sel_ref: (n_tiles,) int32 in SMEM — 0 = node encoder, 1 = edge encoder.
    """
    sel = sel_ref[pl.program_id(0)]
    w1 = w1_ref[sel]
    b1 = b1_ref[sel]
    w2 = w2_ref[sel]
    b2 = b2_ref[sel]
    h = jnp.dot(x_ref[...], w1, preferred_element_type=jnp.float32)
    h = jnp.maximum(h + b1, 0.0)
    y = jnp.dot(h.astype(w2.dtype), w2, preferred_element_type=jnp.float32)
    y = jnp.maximum(y + b2, 0.0)
    o_ref[...] = y.astype(o_ref.dtype)


class GraphEncoderParams:
    """Deterministic parameter construction mirroring the PyTorch __init__."""

    def __init__(self, node_dim, edge_dim, encoding_size=64, key=None):
        if key is None:
            key = jax.random.PRNGKey(0)
        keys = jax.random.split(key, 8)

        def linear(kw, kb, d_in, d_out):
            # uniform(-1/sqrt(d_in), 1/sqrt(d_in)) like torch.nn.Linear default
            bound = 1.0 / jnp.sqrt(jnp.float32(d_in))
            w = jax.random.uniform(kw, (d_in, d_out), jnp.float32, -bound, bound)
            b = jax.random.uniform(kb, (1, d_out), jnp.float32, -bound, bound)
            return w, b

        self.node_w1, self.node_b1 = linear(keys[0], keys[1], node_dim, encoding_size)
        self.node_w2, self.node_b2 = linear(keys[2], keys[3], encoding_size, encoding_size)
        self.edge_w1, self.edge_b1 = linear(keys[4], keys[5], edge_dim, encoding_size)
        self.edge_w2, self.edge_b2 = linear(keys[6], keys[7], encoding_size, encoding_size)


class GraphEncoderPallas:
    """Pads/stacks the node & edge MLP weights once and runs the fused kernel."""

    def __init__(self, params: GraphEncoderParams, node_dim, edge_dim, encoding_size):
        self.node_dim = node_dim
        self.edge_dim = edge_dim
        self.encoding_size = encoding_size
        # K dim: only pad to a small alignment (NOT 128) — activations stay narrow.
        self.d_pad = _round_up(max(node_dim, edge_dim, 1), _ROW_ALIGN)
        # N dim: 128 lanes so output stores are unmasked full-lane vst.
        self.e_pad = _round_up(max(encoding_size, 1), _LANE)

        def pad_w1(w):
            return _pad2d(w, self.d_pad, self.e_pad, jnp.bfloat16)

        def pad_w2(w):
            return _pad2d(w, self.e_pad, self.e_pad, jnp.bfloat16)

        def pad_b(b):
            return _pad2d(b, 1, self.e_pad, jnp.float32)

        # index 0 == node stream, index 1 == edge stream
        self.w1 = jnp.stack([pad_w1(params.node_w1), pad_w1(params.edge_w1)])  # (2, D_pad, E_pad) bf16
        self.b1 = jnp.stack([pad_b(params.node_b1), pad_b(params.edge_b1)])    # (2, 1, E_pad)     f32
        self.w2 = jnp.stack([pad_w2(params.node_w2), pad_w2(params.edge_w2)])  # (2, E_pad, E_pad) bf16
        self.b2 = jnp.stack([pad_b(params.node_b2), pad_b(params.edge_b2)])    # (2, 1, E_pad)     f32

        self._weight_bytes = int(
            (self.w1.size + self.w2.size) * 2 + (self.b1.size + self.b2.size) * 4
        )

    def __call__(self, x, edge_features, *, max_tile_rows=2048):
        n_nodes = x.shape[0]
        n_edges = edge_features.shape[0]
        rows_max = max(n_nodes, n_edges, 1)

        # Row tile: multiple of 16 (bf16 sublane packing), large to amortize the
        # ~0.35us/step overhead, but capped so the bigger stream still yields >=2
        # grid steps (keeps both v7x TensorCores busy via the "parallel" axis).
        two_core_cap = _round_up(_cdiv(rows_max, 2), _ROW_ALIGN)
        tile_n = max(_ROW_ALIGN, min(max_tile_rows, two_core_cap))

        node_tiles = _cdiv(max(n_nodes, 1), tile_n)
        edge_tiles = _cdiv(max(n_edges, 1), tile_n)
        n_tiles = node_tiles + edge_tiles
        n_rows = n_tiles * tile_n

        # Zero-pad row tails + (small) feature tail and concatenate the two streams.
        # With the narrow d_pad this pre-pass is ~1x the input bytes (was 8-16x).
        x_p = _pad2d(x, node_tiles * tile_n, self.d_pad, jnp.bfloat16)
        e_p = _pad2d(edge_features, edge_tiles * tile_n, self.d_pad, jnp.bfloat16)
        rows = jnp.concatenate([x_p, e_p], axis=0)  # (n_rows, D_pad) bf16

        # Which MLP each row-tile uses (0 = node encoder, 1 = edge encoder).
        sel = jnp.concatenate([jnp.zeros((node_tiles,), jnp.int32),
                               jnp.ones((edge_tiles,), jnp.int32)])

        flops = 2 * n_rows * (self.d_pad * self.e_pad + self.e_pad * self.e_pad)
        bytes_accessed = (rows.size * 2                 # bf16 activations in
                          + self._weight_bytes          # resident weights (once)
                          + n_rows * self.e_pad * 2)    # bf16 output

        # Explicit VMEM budget: weights + double-buffered in/out tiles + f32
        # intermediates, with 2x slack; capped well under v7x's 64 MiB physical VMEM.
        per_tile_bytes = (2 * tile_n * self.d_pad * 2       # double-buffered bf16 input
                          + 2 * tile_n * self.e_pad * 2     # double-buffered bf16 output
                          + 2 * tile_n * self.e_pad * 4)    # f32 intermediates h / y
        vmem_limit = int(min(24 * 1024 * 1024,
                             max(4 * 1024 * 1024,
                                 2 * (self._weight_bytes + per_tile_bytes))))

        out = pl.pallas_call(
            _fused_mlp2_kernel,
            out_shape=jax.ShapeDtypeStruct((n_rows, self.e_pad), jnp.bfloat16),
            grid_spec=pltpu.PrefetchScalarGridSpec(
                num_scalar_prefetch=1,
                grid=(n_tiles,),
                in_specs=[
                    # activations: row-tiled, narrow last dim == full array width
                    pl.BlockSpec((tile_n, self.d_pad), lambda i, s: (i, 0)),
                    # both weight sets resident (constant index_map -> DMA'd once);
                    # the kernel selects node/edge via the prefetched scalar.
                    pl.BlockSpec((2, self.d_pad, self.e_pad), lambda i, s: (0, 0, 0)),
                    pl.BlockSpec((2, 1, self.e_pad), lambda i, s: (0, 0, 0)),
                    pl.BlockSpec((2, self.e_pad, self.e_pad), lambda i, s: (0, 0, 0)),
                    pl.BlockSpec((2, 1, self.e_pad), lambda i, s: (0, 0, 0)),
                ],
                out_specs=pl.BlockSpec((tile_n, self.e_pad), lambda i, s: (i, 0)),
            ),
            compiler_params=pltpu.CompilerParams(
                dimension_semantics=("parallel",),
                vmem_limit_bytes=vmem_limit,
            ),
            cost_estimate=pl.CostEstimate(
                flops=flops, transcendentals=0, bytes_accessed=bytes_accessed),
        )(sel, rows, self.w1, self.b1, self.w2, self.b2)

        # Slice back to the module's interface (f32, encoding_size columns).
        # In a fused pipeline the consumer would read the padded bf16 buffer directly.
        x_enc = out[:n_nodes, : self.encoding_size].astype(jnp.float32)
        e_off = node_tiles * tile_n
        e_enc = out[e_off: e_off + n_edges, : self.encoding_size].astype(jnp.float32)
        return x_enc, e_enc


def _reference_forward(params, x, edge_features, dtype=jnp.float32):
    """Plain-JAX reference; dtype=bfloat16 emulates the kernel's MXU/output rounding."""

    def mlp_ref(a, w1, b1, w2, b2):
        a32 = a.astype(dtype).astype(jnp.float32)
        w1_32 = w1.astype(dtype).astype(jnp.float32)
        w2_32 = w2.astype(dtype).astype(jnp.float32)
        h = jnp.maximum(a32 @ w1_32 + b1, 0.0)
        h = h.astype(dtype).astype(jnp.float32)
        y = jnp.maximum(h @ w2_32 + b2, 0.0)
        return y.astype(dtype).astype(jnp.float32)

    return (mlp_ref(x, params.node_w1, params.node_b1, params.node_w2, params.node_b2),
            mlp_ref(edge_features, params.edge_w1, params.edge_b1,
                    params.edge_w2, params.edge_b2))


def _check(encoder, params, x, edge_features, encoding_size):
    x_enc, e_enc = encoder(x, edge_features)
    jax.block_until_ready((x_enc, e_enc))

    assert x_enc.shape == (x.shape[0], encoding_size)
    assert e_enc.shape == (edge_features.shape[0], encoding_size)

    # Tight check against a bf16-rounded reference (same operand/output precision).
    x_bf, e_bf = _reference_forward(params, x, edge_features, dtype=jnp.bfloat16)
    assert jnp.allclose(x_enc, x_bf, atol=2e-2, rtol=2e-2), "node encoder mismatch (bf16 ref)"
    assert jnp.allclose(e_enc, e_bf, atol=2e-2, rtol=2e-2), "edge encoder mismatch (bf16 ref)"

    # Loose check against the full-f32 reference (original PyTorch semantics).
    x_f32, e_f32 = _reference_forward(params, x, edge_features, dtype=jnp.float32)
    assert jnp.allclose(x_enc, x_f32, atol=8e-2, rtol=8e-2), "node encoder mismatch (f32 ref)"
    assert jnp.allclose(e_enc, e_f32, atol=8e-2, rtol=8e-2), "edge encoder mismatch (f32 ref)"


if __name__ == "__main__":
    node_dim, edge_dim, encoding_size = 16, 8, 64

    key = jax.random.PRNGKey(0)
    k_params, k_x, k_e, k_x2, k_e2 = jax.random.split(key, 5)

    params = GraphEncoderParams(node_dim, edge_dim, encoding_size, key=k_params)
    encoder = GraphEncoderPallas(params, node_dim, edge_dim, encoding_size)

    # Small graph: 8 nodes, 12 edges (single tile per stream).
    x_small = jax.random.normal(k_x, (8, node_dim), jnp.float32)
    e_small = jax.random.normal(k_e, (12, edge_dim), jnp.float32)
    _check(encoder, params, x_small, e_small, encoding_size)

    # Larger graph: exercises multiple tiles per stream and row-tail padding.
    x_big = jax.random.normal(k_x2, (300, node_dim), jnp.float32)
    e_big = jax.random.normal(k_e2, (500, edge_dim), jnp.float32)
    _check(encoder, params, x_big, e_big, encoding_size)

    print("KERNEL_OK")
</pallas_src>

<mosaic_0001>
module attributes {stable_mosaic.version = 11 : i64} {
  func.func @_fused_mlp2_kernel(%arg0: i32, %arg1: memref<2xi32, #tpu.memory_space<smem>>, %arg2: memref<16x16xbf16, #tpu.memory_space<vmem>>, %arg3: memref<2x16x128xbf16, #tpu.memory_space<vmem>>, %arg4: memref<2x1x128xf32, #tpu.memory_space<vmem>>, %arg5: memref<2x128x128xbf16, #tpu.memory_space<vmem>>, %arg6: memref<2x1x128xf32, #tpu.memory_space<vmem>>, %arg7: memref<16x128xbf16, #tpu.memory_space<vmem>>) attributes {dimension_semantics = [#tpu.dimension_semantics<parallel>], iteration_bounds = array<i64: 2>, scalar_prefetch = 1 : i64, scratch_operands = 0 : i64, tpu.core_type = #tpu.core_type<tc>, window_params = [{transform_indices = @transform_0, window_bounds = array<i64: 16, 16>}, {pipeline_mode = #tpu.pipeline_mode<synchronous>, transform_indices = @transform_1, window_bounds = array<i64: 2, 16, 128>}, {pipeline_mode = #tpu.pipeline_mode<synchronous>, transform_indices = @transform_2, window_bounds = array<i64: 2, 1, 128>}, {pipeline_mode = #tpu.pipeline_mode<synchronous>, transform_indices = @transform_3, window_bounds = array<i64: 2, 128, 128>}, {pipeline_mode = #tpu.pipeline_mode<synchronous>, transform_indices = @transform_4, window_bounds = array<i64: 2, 1, 128>}, {transform_indices = @transform_5, window_bounds = array<i64: 16, 128>}]} {
    %0 = arith.index_cast %arg0 : i32 to index
    %1 = memref.load %arg1[%0] : memref<2xi32, #tpu.memory_space<smem>>
    %2 = arith.index_cast %1 : i32 to index
    %c0 = arith.constant 0 : index
    %c0_0 = arith.constant 0 : index
    %3 = vector.load %arg3[%2, %c0, %c0_0] : memref<2x16x128xbf16, #tpu.memory_space<vmem>>, vector<1x16x128xbf16>
    %4 = vector.shape_cast %3 : vector<1x16x128xbf16> to vector<16x128xbf16>
    %5 = arith.index_cast %1 : i32 to index
    %c0_1 = arith.constant 0 : index
    %c0_2 = arith.constant 0 : index
    %6 = vector.load %arg4[%5, %c0_1, %c0_2] : memref<2x1x128xf32, #tpu.memory_space<vmem>>, vector<1x1x128xf32>
    %7 = vector.shape_cast %6 : vector<1x1x128xf32> to vector<1x128xf32>
    %8 = arith.index_cast %1 : i32 to index
    %c0_3 = arith.constant 0 : index
    %c0_4 = arith.constant 0 : index
    %9 = vector.load %arg5[%8, %c0_3, %c0_4] : memref<2x128x128xbf16, #tpu.memory_space<vmem>>, vector<1x128x128xbf16>
    %10 = vector.shape_cast %9 : vector<1x128x128xbf16> to vector<128x128xbf16>
    %11 = arith.index_cast %1 : i32 to index
    %c0_5 = arith.constant 0 : index
    %c0_6 = arith.constant 0 : index
    %12 = vector.load %arg6[%11, %c0_5, %c0_6] : memref<2x1x128xf32, #tpu.memory_space<vmem>>, vector<1x1x128xf32>
    %13 = vector.shape_cast %12 : vector<1x1x128xf32> to vector<1x128xf32>
    %c0_7 = arith.constant 0 : index
    %c0_8 = arith.constant 0 : index
    %14 = vector.load %arg2[%c0_7, %c0_8] : memref<16x16xbf16, #tpu.memory_space<vmem>>, vector<16x16xbf16>
    %cst = arith.constant dense<0.000000e+00> : vector<16x128xf32>
    %15 = tpu.matmul %14, %4, %cst {dimension_numbers = #tpu.dot_dimension_numbers<[1], [0], [0], [1], [0, 0, 1, 1], [], []>} : vector<16x16xbf16>, vector<16x128xbf16>, vector<16x128xf32> -> vector<16x128xf32>
    %16 = vector.broadcast %7 : vector<1x128xf32> to vector<16x128xf32>
    %17 = arith.addf %15, %16 : vector<16x128xf32>
    %cst_9 = arith.constant 0.000000e+00 : f32
    %18 = vector.broadcast %cst_9 : f32 to vector<16x128xf32>
    %19 = arith.maximumf %17, %18 : vector<16x128xf32>
    %20 = arith.truncf %19 : vector<16x128xf32> to vector<16x128xbf16>
    %cst_10 = arith.constant dense<0.000000e+00> : vector<16x128xf32>
    %21 = tpu.matmul %20, %10, %cst_10 {dimension_numbers = #tpu.dot_dimension_numbers<[1], [0], [0], [1], [0, 0, 1, 1], [], []>} : vector<16x128xbf16>, vector<128x128xbf16>, vector<16x128xf32> -> vector<16x128xf32>
    %22 = vector.broadcast %13 : vector<1x128xf32> to vector<16x128xf32>
    %23 = arith.addf %21, %22 : vector<16x128xf32>
    %cst_11 = arith.constant 0.000000e+00 : f32
    %24 = vector.broadcast %cst_11 : f32 to vector<16x128xf32>
    %25 = arith.maximumf %23, %24 : vector<16x128xf32>
    %26 = arith.truncf %25 : vector<16x128xf32> to vector<16x128xbf16>
    %c0_12 = arith.constant 0 : index
    %c0_13 = arith.constant 0 : index
    %27 = vector.load %arg7[%c0_12, %c0_13] : memref<16x128xbf16, #tpu.memory_space<vmem>>, vector<16x128xbf16>
    tpu.vector_store %arg7[%c0_12, %c0_13], %26 {strides = array<i32>} : memref<16x128xbf16, #tpu.memory_space<vmem>>, vector<16x128xbf16>,
    return
  }
  func.func @transform_0(%arg0: i32, %arg1: memref<2xi32, #tpu.memory_space<smem>>) -> (i32, i32) {
    %c0_i32 = arith.constant 0 : i32
    %c0_i32_0 = arith.constant 0 : i32
    return %arg0, %c0_i32 : i32, i32
  }
  func.func @transform_1(%arg0: i32, %arg1: memref<2xi32, #tpu.memory_space<smem>>) -> (i32, i32, i32) {
    %c0_i32 = arith.constant 0 : i32
    %c0_i32_0 = arith.constant 0 : i32
    %c0_i32_1 = arith.constant 0 : i32
    %c0_i32_2 = arith.constant 0 : i32
    return %c0_i32, %c0_i32_0, %c0_i32_1 : i32, i32, i32
  }
  func.func @transform_2(%arg0: i32, %arg1: memref<2xi32, #tpu.memory_space<smem>>) -> (i32, i32, i32) {
    %c0_i32 = arith.constant 0 : i32
    %c0_i32_0 = arith.constant 0 : i32
    %c0_i32_1 = arith.constant 0 : i32
    %c0_i32_2 = arith.constant 0 : i32
    return %c0_i32, %c0_i32_0, %c0_i32_1 : i32, i32, i32
  }
  func.func @transform_3(%arg0: i32, %arg1: memref<2xi32, #tpu.memory_space<smem>>) -> (i32, i32, i32) {
    %c0_i32 = arith.constant 0 : i32
    %c0_i32_0 = arith.constant 0 : i32
    %c0_i32_1 = arith.constant 0 : i32
    %c0_i32_2 = arith.constant 0 : i32
    return %c0_i32, %c0_i32_0, %c0_i32_1 : i32, i32, i32
  }
  func.func @transform_4(%arg0: i32, %arg1: memref<2xi32, #tpu.memory_space<smem>>) -> (i32, i32, i32) {
    %c0_i32 = arith.constant 0 : i32
    %c0_i32_0 = arith.constant 0 : i32
    %c0_i32_1 = arith.constant 0 : i32
    %c0_i32_2 = arith.constant 0 : i32
    return %c0_i32, %c0_i32_0, %c0_i32_1 : i32, i32, i32
  }
  func.func @transform_5(%arg0: i32, %arg1: memref<2xi32, #tpu.memory_space<smem>>) -> (i32, i32) {
    %c0_i32 = arith.constant 0 : i32
    %c0_i32_0 = arith.constant 0 : i32
    return %arg0, %c0_i32 : i32, i32
  }
}

</mosaic_0001>

<llo_original>
// kernel: tpu_custom_call.1
$region0: #{tpu_custom_call.1}
  #allocation0 [shape = 'u32[]', space=smem, size = 0x4, offset = 0x4, fixed_abs, tag = 'smem constant byte address 0x4 - core index']
  #allocation1 [shape = 'u32[72,128]{1,0:T(1,128)}', space=vmem, size = 0x9000, scoped, tag = 'internal scratch']
  #allocation2 [shape = 's32[1]{0}', space=sflag, size = 0x4, scoped, tag = 'scoped memory for tpu_custom_call.1']
  #allocation3 [shape = 'u8[512]{0}', space=smem, size = 0x200, scoped, tag = 'prefetched SMEM operand 0']
  %s0 = inlined_call_operand.vmem [shape: s32[2], index: 0, kind: input, shape index: {}]
  %s1 = inlined_call_operand.vmem [shape: bf16[32,16], index: 1, kind: input, shape index: {}]
  %s2 = inlined_call_operand.vmem [shape: bf16[2,16,128], index: 2, kind: input, shape index: {}]
  %s3 = inlined_call_operand.vmem [shape: f32[2,1,128], index: 3, kind: input, shape index: {}]
  %s4 = inlined_call_operand.hbm [shape: bf16[2,128,128], index: 4, kind: input, shape index: {}]
  %s5 = inlined_call_operand.vmem [shape: f32[2,1,128], index: 5, kind: input, shape index: {}]
  %s6 = inlined_call_operand.hbm [shape: bf16[32,128], index: 6, kind: output, shape index: {}]
  %s7 = sld [smem:[#allocation0]]
  $region57: #{tpu_custom_call.1} parent=0
    _
  %s9 = ssub.s32 1, %s7
  %s10 = scalar_select 0, %s9, %s7
  %s12 = sshll.u32 %s0, 4
  %s13 = int_to_ptr.vmem [resolvable:$true] %s12
  %15 = dma.vmem_to_smem %s13, 16, [#allocation3], [#allocation2]
  %17 = dma.done [#allocation2], 16
  %18 = sfence
  $region1: #{tpu_custom_call.1} parent=0
    #allocation4 [shape = 'u8[65536]{0}', space=vmem, size = 0x10000, scoped, tag = 'input window, operand 4, single buffered']
    #allocation5 [shape = 's32[2]{0}', space=sflag, size = 0x8, scoped, tag = 'scoped memory for tpu_custom_call.1']
    #allocation6 [shape = 's32[2]{0}', space=sflag, size = 0x8, scoped, tag = 'scoped memory for tpu_custom_call.1']
    #allocation7 [shape = 'u8[8192]{0}', space=vmem, size = 0x2000, scoped, tag = 'output window, operand 0']
    %19 = vsyncpa [#allocation5], 0
    %20 = vsyncpa [#allocation6], 0
    %s21 = scalar_lea.sflag [#allocation6], 1
    %22 = vsyncpa %s21, 0
    loop: start=0, step=1, limit=4
    $region2: #{tpu_custom_call.1} parent=1 // loop_pre_header
      _
    $region3: #{tpu_custom_call.1} parent=1 // loop_header
      %s24 = sphi 0, %s28
      %p25 = scmp.ge.s32.totalorder %s24, 4
      %s34 = sphi 0, %s36
      %s37 = sphi 0, %s34
      %s38 = sphi 0, %s37
      %s54 = sphi 0, %s38
      %s58 = sphi 0, %s58
      %s60 = sphi 0, %s58
      %s61 = sphi 0, %s60
      %s75 = sphi 0, %s61
      %s79 = sphi 0, %s79
      %s81 = sphi 0, %s79
      %s82 = sphi 0, %s81
      %s96 = sphi 0, %s82
      %s100 = sphi 0, %s100
      %s102 = sphi 0, %s100
      %s103 = sphi 0, %s102
      %s117 = sphi 0, %s103
      %s121 = sphi 0, %s121
      %s123 = sphi 0, %s121
      %s124 = sphi 0, %s123
      %s138 = sphi 0, %s124
      %s144 = sphi 0, %s146
      %s147 = sphi 0, %s144
      %s148 = sphi 0, %s147
      %s164 = sphi 0, %s148
    $region4: #{tpu_custom_call.1} parent=1 // loop_header_branch
      %27 = sbr.rel (%p25) target = $region8
    $region5: #{tpu_custom_call.1} parent=1 // loop_body
      %s29 = ssub.s32 %s24, 1
      %s30 = ssub.s32 %s24, 2
      %s31 = sadd.s32 %s24, 1
      %s32 = ssub.s32 %s24, %s31
      %p33 = scmp.eq.s32.totalorder %s32, 0
      %s35 = sadd.s32 %s34, 1
      %s36 = scalar_select %p33, %s34, %s35
      %p39 = pneg %p33
      %p40 = scmp.eq.s32.totalorder %s24, 1
      %p41 = por %p39, %p40
      %p42 = scmp.ne.s32.totalorder %s34, %s37
      %p43 = scmp.eq.s32.totalorder %s24, 0
      %p44 = por %p42, %p43
      %p45 = scmp.ne.s32.totalorder %s34, %s37
      %p46 = scmp.eq.s32.totalorder %s29, 1
      %p47 = por %p45, %p46
      %p48 = scmp.ne.s32.totalorder %s37, %s38
      %p49 = scmp.eq.s32.totalorder %s29, 0
      %p50 = por %p48, %p49
      %p51 = scmp.ne.s32.totalorder %s37, %s38
      %p52 = scmp.eq.s32.totalorder %s30, 1
      %p53 = por %p51, %p52
      %p55 = scmp.ne.s32.totalorder %s38, %s54
      %p56 = scmp.eq.s32.totalorder %s30, 0
      %p57 = por %p55, %p56
      %s59 = sadd.s32 %s58, 1
      %p62 = scmp.eq.s32.totalorder %s24, 1
      %p63 = scmp.ne.s32.totalorder %s58, %s60
      %p64 = scmp.eq.s32.totalorder %s24, 0
      %p65 = por %p63, %p64
      %p66 = scmp.ne.s32.totalorder %s58, %s60
      %p67 = scmp.eq.s32.totalorder %s29, 1
      %p68 = por %p66, %p67
      %p69 = scmp.ne.s32.totalorder %s60, %s61
      %p70 = scmp.eq.s32.totalorder %s29, 0
      %p71 = por %p69, %p70
      %p72 = scmp.ne.s32.totalorder %s60, %s61
      %p73 = scmp.eq.s32.totalorder %s30, 1
      %p74 = por %p72, %p73
      %p76 = scmp.ne.s32.totalorder %s61, %s75
      %p77 = scmp.eq.s32.totalorder %s30, 0
      %p78 = por %p76, %p77
      %s80 = sadd.s32 %s79, 1
      %p83 = scmp.eq.s32.totalorder %s24, 1
      %p84 = scmp.ne.s32.totalorder %s79, %s81
      %p85 = scmp.eq.s32.totalorder %s24, 0
      %p86 = por %p84, %p85
      %p87 = scmp.ne.s32.totalorder %s79, %s81
      %p88 = scmp.eq.s32.totalorder %s29, 1
      %p89 = por %p87, %p88
      %p90 = scmp.ne.s32.totalorder %s81, %s82
      %p91 = scmp.eq.s32.totalorder %s29, 0
      %p92 = por %p90, %p91
      %p93 = scmp.ne.s32.totalorder %s81, %s82
      %p94 = scmp.eq.s32.totalorder %s30, 1
      %p95 = por %p93, %p94
      %p97 = scmp.ne.s32.totalorder %s82, %s96
      %p98 = scmp.eq.s32.totalorder %s30, 0
      %p99 = por %p97, %p98
      %s101 = sadd.s32 %s100, 1
      %p104 = scmp.eq.s32.totalorder %s24, 1
      %p105 = scmp.ne.s32.totalorder %s100, %s102
      %p106 = scmp.eq.s32.totalorder %s24, 0
      %p107 = por %p105, %p106
      %p108 = scmp.ne.s32.totalorder %s100, %s102
      %p109 = scmp.eq.s32.totalorder %s29, 1
      %p110 = por %p108, %p109
      %p111 = scmp.ne.s32.totalorder %s102, %s103
      %p112 = scmp.eq.s32.totalorder %s29, 0
      %p113 = por %p111, %p112
      %p114 = scmp.ne.s32.totalorder %s102, %s103
      %p115 = scmp.eq.s32.totalorder %s30, 1
      %p116 = por %p114, %p115
      %p118 = scmp.ne.s32.totalorder %s103, %s117
      %p119 = scmp.eq.s32.totalorder %s30, 0
      %p120 = por %p118, %p119
      %s122 = sadd.s32 %s121, 1
      %p125 = scmp.eq.s32.totalorder %s24, 1
      %p126 = scmp.ne.s32.totalorder %s121, %s123
      %p127 = scmp.eq.s32.totalorder %s24, 0
      %p128 = por %p126, %p127
      %p129 = scmp.ne.s32.totalorder %s121, %s123
      %p130 = scmp.eq.s32.totalorder %s29, 1
      %p131 = por %p129, %p130
      %p132 = scmp.ne.s32.totalorder %s123, %s124
      %p133 = scmp.eq.s32.totalorder %s29, 0
      %p134 = por %p132, %p133
      %p135 = scmp.ne.s32.totalorder %s123, %s124
      %p136 = scmp.eq.s32.totalorder %s30, 1
      %p137 = por %p135, %p136
      %p139 = scmp.ne.s32.totalorder %s124, %s138
      %p140 = scmp.eq.s32.totalorder %s30, 0
      %p141 = por %p139, %p140
      %s142 = ssub.s32 %s24, %s31
      %p143 = scmp.eq.s32.totalorder %s142, 0
      %s145 = sadd.s32 %s144, 1
      %s146 = scalar_select %p143, %s144, %s145
      %p149 = pneg %p143
      %p150 = scmp.eq.s32.totalorder %s24, 1
      %p151 = por %p149, %p150
      %p152 = scmp.ne.s32.totalorder %s144, %s147
      %p153 = scmp.eq.s32.totalorder %s24, 0
      %p154 = por %p152, %p153
      %p155 = scmp.ne.s32.totalorder %s144, %s147
      %p156 = scmp.eq.s32.totalorder %s29, 1
      %p157 = por %p155, %p156
      %p158 = scmp.ne.s32.totalorder %s147, %s148
      %p159 = scmp.eq.s32.totalorder %s29, 0
      %p160 = por %p158, %p159
      %p161 = scmp.ne.s32.totalorder %s147, %s148
      %p162 = scmp.eq.s32.totalorder %s30, 1
      %p163 = por %p161, %p162
      %p165 = scmp.ne.s32.totalorder %s148, %s164
      %p166 = scmp.eq.s32.totalorder %s30, 0
      %p167 = por %p165, %p166
      %p168 = scmp.le.s32.totalorder 1, %s24
      %p169 = scmp.lt.s32.totalorder %s24, 3
      %p170 = pnand %p168, %p169
      %p171 = pneg %p170
      // Predicated region
      $region9: #{tpu_custom_call.1} parent=5 // pred_check
        _
      $region10: #{tpu_custom_call.1} parent=5 // pred_check_branch
        %173 = sbr.rel (%p170) target = $region12
      $region11: #{tpu_custom_call.1} parent=5 // pred_region
        %s174 = ssub.s32 %s24, 1
        // Predicated region
        $region13: #{tpu_custom_call.1} parent=11 // pred_check
          %p175 = pneg %p71
        $region14: #{tpu_custom_call.1} parent=11 // pred_check_branch
          %177 = sbr.rel (%p175) target = $region16
        $region15: #{tpu_custom_call.1} parent=11 // pred_region
          _
        $region16: #{tpu_custom_call.1} parent=11 // pred_fallthru
          _
        // Predicated region
        $region17: #{tpu_custom_call.1} parent=11 // pred_check
          %p178 = pneg %p92
        $region18: #{tpu_custom_call.1} parent=11 // pred_check_branch
          %180 = sbr.rel (%p178) target = $region20
        $region19: #{tpu_custom_call.1} parent=11 // pred_region
          _
        $region20: #{tpu_custom_call.1} parent=11 // pred_fallthru
          _
        // Predicated region
        $region21: #{tpu_custom_call.1} parent=11 // pred_check
          %p181 = pneg %p113
        $region22: #{tpu_custom_call.1} parent=11 // pred_check_branch
          %183 = sbr.rel (%p181) target = $region24
        $region23: #{tpu_custom_call.1} parent=11 // pred_region
          %185 = vsyncadd [#allocation5], 0
          %s186 = sshll.u32 %s4, 4
          %s187 = int_to_ptr.hbm [resolvable:$true] %s186
          %s188 = sshll.u32 [#allocation4], 4
          %s189 = int_to_ptr.vmem [resolvable:$true] %s188
          %194 = dma.hbm_to_vmem [thread:$0]  %s187, 2048, %s189, [#allocation5], 64, 64, 4
        $region24: #{tpu_custom_call.1} parent=11 // pred_fallthru
          _
        // Predicated region
        $region25: #{tpu_custom_call.1} parent=11 // pred_check
          %p195 = pneg %p134
        $region26: #{tpu_custom_call.1} parent=11 // pred_check_branch
          %197 = sbr.rel (%p195) target = $region28
        $region27: #{tpu_custom_call.1} parent=11 // pred_region
          _
        $region28: #{tpu_custom_call.1} parent=11 // pred_fallthru
          _
      $region12: #{tpu_custom_call.1} parent=5 // pred_fallthru
        _
      %p198 = scmp.lt.s32.totalorder %s24, 2
      // Predicated region
      $region29: #{tpu_custom_call.1} parent=5 // pred_check
        %p199 = pneg %p198
      $region30: #{tpu_custom_call.1} parent=5 // pred_check_branch
        %201 = sbr.rel (%p199) target = $region32
      $region31: #{tpu_custom_call.1} parent=5 // pred_region
        // Predicated region
        $region33: #{tpu_custom_call.1} parent=31 // pred_check
          %p202 = pneg %p44
        $region34: #{tpu_custom_call.1} parent=31 // pred_check_branch
          %204 = sbr.rel (%p202) target = $region36
        $region35: #{tpu_custom_call.1} parent=31 // pred_region
          %s205 = smul.u32 2, %s24
          %p206 = scmp.lt.s32.totalorder %s205, 3
          %s207 = scalar_select %p206, %s205, 3
          %s208 = smul.addr %s207, 4
          %s209 = scalar_lea.vmem %s1, %s208
          %s210 = smul.u32 2, %s24
        $region36: #{tpu_custom_call.1} parent=31 // pred_fallthru
          _
      $region32: #{tpu_custom_call.1} parent=5 // pred_fallthru
        _
      %p211 = scmp.le.s32.totalorder 1, %s24
      %p212 = scmp.lt.s32.totalorder %s24, 3
      %p213 = pnand %p211, %p212
      %p214 = pneg %p213
      // Predicated region
      $region37: #{tpu_custom_call.1} parent=5 // pred_check
        _
      $region38: #{tpu_custom_call.1} parent=5 // pred_check_branch
        %216 = sbr.rel (%p213) target = $region40
      $region39: #{tpu_custom_call.1} parent=5 // pred_region
        %s217 = ssub.s32 %s24, 1
        // Predicated region
        $region41: #{tpu_custom_call.1} parent=39 // pred_check
          %p218 = pneg %p113
        $region42: #{tpu_custom_call.1} parent=39 // pred_check_branch
          %220 = sbr.rel (%p218) target = $region44
        $region43: #{tpu_custom_call.1} parent=39 // pred_region
          %222 = dma.done [#allocation5], 2048
        $region44: #{tpu_custom_call.1} parent=39 // pred_fallthru
          _
        %s223 = smul.u32 2, %s29
        %p224 = scmp.lt.s32.totalorder %s223, 3
        %s225 = scalar_select %p224, %s223, 3
        %s226 = smul.addr %s225, 4
        %s227 = scalar_lea.vmem %s1, %s226
        %p228 = pneg %p50
        %p229 = pneg %p47
        %p230 = pneg %p71
        %p231 = pneg %p68
        %p232 = pneg %p92
        %p233 = pneg %p89
        %p234 = pneg %p113
        %p235 = pneg %p110
        %p236 = pneg %p134
        %p237 = pneg %p131
        %p238 = pneg %p160
        %p239 = pneg %p157
        %s240 = sand.u32 %s147, 1
        %s241 = scalar_lea.sflag [#allocation6], %s240
        %s242 = sand.u32 %s147, 1
        %s243 = smul.addr %s242, 8
        %s244 = scalar_lea.vmem [#allocation7], %s243
        %s245 = smul.u32 2, %s29
        %p246 = scmp.lt.s32.totalorder %s245, 3
        %s247 = scalar_select %p246, %s245, 3
        %s248 = smul.addr %s247, 4
        %s249 = scalar_lea.vmem %s1, %s248
        %s250 = smul.u32 2, %s29
        %s251 = smul.u32 2, %s29
        %s253 = sld [smem:[#allocation3 + %s29]]
        %s254 = smul.u32 %s253, 2
        %s255 = smul.addr %s254, 4
        %s256 = scalar_lea.vmem %s2, %s255
        %v257 = vld [vmem:[%s256] sm:$0xf]
        %v258 = vld [vmem:[%s256 + $0x4] sm:$0xf]
        %s259 = scalar_lea.vmem %s3, %s253
        %v260 = vld [vmem:[%s259] sm:$0x1]
        %s261 = smul.u32 %s253, 16
        %s262 = smul.addr %s261, 4
        %s263 = scalar_lea.vmem [#allocation4], %s262
        %v264 = vld [vmem:[%s263] sm:$0xf]
        %v265 = vld [vmem:[%s263 + $0x4] sm:$0xf]
        %v266 = vld [vmem:[%s263 + $0x8] sm:$0xf]
        %v267 = vld [vmem:[%s263 + $0xc] sm:$0xf]
        %v268 = vld [vmem:[%s263 + $0x10] sm:$0xf]
        %v269 = vld [vmem:[%s263 + $0x14] sm:$0xf]
        %v270 = vld [vmem:[%s263 + $0x18] sm:$0xf]
        %v271 = vld [vmem:[%s263 + $0x1c] sm:$0xf]
        %v272 = vld [vmem:[%s263 + $0x20] sm:$0xf]
        %v273 = vld [vmem:[%s263 + $0x24] sm:$0xf]
        %v274 = vld [vmem:[%s263 + $0x28] sm:$0xf]
        %v275 = vld [vmem:[%s263 + $0x2c] sm:$0xf]
        %v276 = vld [vmem:[%s263 + $0x30] sm:$0xf]
        %v277 = vld [vmem:[%s263 + $0x34] sm:$0xf]
        %v278 = vld [vmem:[%s263 + $0x38] sm:$0xf]
        %v279 = vld [vmem:[%s263 + $0x3c] sm:$0xf]
        %s280 = scalar_lea.vmem %s5, %s253
        %v281 = vld [vmem:[%s280] sm:$0x1]
        %v282 = vld [vmem:[%s249] sm:$0xf]
        %v283 = vld [vmem:[%s249 + $0x4] sm:$0xf]
        %v285 = vperm.slane %v260, 0
        %v289 = vunpack.c.l.b16 %v282
        %v290 = vunpack.c.l.b16 %v283
        %v291 = vpack.c.b16 %v290, %v289
        %v294 = vunpack.c.l.b16 %v257
        %v295 = vunpack.c.l.b16 %v258
        %v296 = vpack.c.b16 %v295, %v294
        %vm298 = vcmask 130048
        %v300 = vsel %vm298, %v291, 0
        %302 = vmatpush.bf16.msra.mxu0 0
        %303 = vmatpush.bf16.msra.mxu0 0
        %304 = vmatpush.bf16.msra.mxu0 0
        %305 = vmatpush.bf16.msra.mxu0 0
        %306 = vmatpush.bf16.msra.mxu0 0
        %307 = vmatpush.bf16.msra.mxu0 0
        %308 = vmatpush.bf16.msra.mxu0 0
        %309 = vmatpush.bf16.msra.mxu0 %v296
        %310 = vmatmul.bf16.gmra.mxu0 %v300
        %v311 = vpop.f32.mrf.mxu0
        %v312 = vadd.f32 %v285, %v311
        %v313 = vpop.f32.mrf.mxu0
        %v314 = vadd.f32 %v285, %v313
        %315 = vdwg.mxu0
        %v316 = vmax.f32 %v312, 0.0
        %v317 = vmax.f32 %v314, 0.0
        %v318 = vpack.c.bf16 %v317, %v316
        %v320 = vperm.slane %v281, 0
        %v338 = vunpack.c.l.b16 %v264
        %v339 = vunpack.c.l.b16 %v265
        %v340 = vunpack.c.l.b16 %v266
        %v341 = vunpack.c.l.b16 %v267
        %v342 = vunpack.c.l.b16 %v268
        %v343 = vunpack.c.l.b16 %v269
        %v344 = vunpack.c.l.b16 %v270
        %v345 = vunpack.c.l.b16 %v271
        %v346 = vunpack.c.l.b16 %v272
        %v347 = vunpack.c.l.b16 %v273
        %v348 = vunpack.c.l.b16 %v274
        %v349 = vunpack.c.l.b16 %v275
        %v350 = vunpack.c.l.b16 %v276
        %v351 = vunpack.c.l.b16 %v277
        %v352 = vunpack.c.l.b16 %v278
        %v353 = vunpack.c.l.b16 %v279
        %v354 = vpack.c.b16 %v339, %v338
        %v355 = vpack.c.b16 %v341, %v340
        %v356 = vpack.c.b16 %v343, %v342
        %v357 = vpack.c.b16 %v345, %v344
        %v358 = vpack.c.b16 %v347, %v346
        %v359 = vpack.c.b16 %v349, %v348
        %v360 = vpack.c.b16 %v351, %v350
        %v361 = vpack.c.b16 %v353, %v352
        %370 = vmatpush.bf16.msra.mxu0 %v361
        %371 = vmatpush.bf16.msra.mxu0 %v360
        %372 = vmatpush.bf16.msra.mxu0 %v359
        %373 = vmatpush.bf16.msra.mxu0 %v358
        %374 = vmatpush.bf16.msra.mxu0 %v357
        %375 = vmatpush.bf16.msra.mxu0 %v356
        %376 = vmatpush.bf16.msra.mxu0 %v355
        %377 = vmatpush.bf16.msra.mxu0 %v354
        %378 = vmatmul.bf16.gmra.mxu0 %v318
        %v379 = vpop.f32.mrf.mxu0
        %v380 = vadd.f32 %v320, %v379
        %v381 = vpop.f32.mrf.mxu0
        %v382 = vadd.f32 %v320, %v381
        %383 = vdwg.mxu0
        %v384 = vmax.f32 %v380, 0.0
        %v385 = vmax.f32 %v382, 0.0
        %v386 = vpack.c.bf16 %v384, %v384
        %v387 = vpack.c.bf16 %v385, %v385
        %388 = vst [vmem:[%s244] sm:$0xf] %v386
        %389 = vst [vmem:[%s244 + $0x4] sm:$0xf] %v387
        %s390 = sand.u32 %s147, 1
        %s391 = scalar_lea.sflag [#allocation6], %s390
        %s392 = sand.u32 %s147, 1
        %s393 = smul.addr %s392, 8
        %s394 = scalar_lea.vmem [#allocation7], %s393
        // Predicated region
        $region45: #{tpu_custom_call.1} parent=39 // pred_check
          %p395 = pneg %p157
        $region46: #{tpu_custom_call.1} parent=39 // pred_check_branch
          %397 = sbr.rel (%p395) target = $region48
        $region47: #{tpu_custom_call.1} parent=39 // pred_region
          %s398 = smul.u32 2, %s29
          %400 = vsyncadd %s391, 0
          %s401 = smul.addr %s398, 4
          %s402 = scalar_lea.hbm %s6, %s401
          %s403 = sshll.u32 %s394, 4
          %s404 = int_to_ptr.vmem [resolvable:$true] %s403
          %s405 = sshll.u32 %s402, 4
          %s406 = int_to_ptr.hbm [resolvable:$true] %s405
          %411 = dma.vmem_to_hbm [thread:$0]  %s404, 128, %s406, %s391, 64, 64, 4
        $region48: #{tpu_custom_call.1} parent=39 // pred_fallthru
          _
      $region40: #{tpu_custom_call.1} parent=5 // pred_fallthru
        _
      %p412 = scmp.le.s32.totalorder 2, %s24
      // Predicated region
      $region49: #{tpu_custom_call.1} parent=5 // pred_check
        %p413 = pneg %p412
      $region50: #{tpu_custom_call.1} parent=5 // pred_check_branch
        %415 = sbr.rel (%p413) target = $region52
      $region51: #{tpu_custom_call.1} parent=5 // pred_region
        %s416 = ssub.s32 %s24, 2
        // Predicated region
        $region53: #{tpu_custom_call.1} parent=51 // pred_check
          %p417 = pneg %p163
        $region54: #{tpu_custom_call.1} parent=51 // pred_check_branch
          %419 = sbr.rel (%p417) target = $region56
        $region55: #{tpu_custom_call.1} parent=51 // pred_region
          %s420 = sand.u32 %s148, 1
          %s421 = scalar_lea.sflag [#allocation6], %s420
          %s422 = sand.u32 %s148, 1
          %s423 = smul.addr %s422, 8
          %s424 = scalar_lea.vmem [#allocation7], %s423
          %426 = dma.done %s421, 128
        $region56: #{tpu_custom_call.1} parent=51 // pred_fallthru
          _
      $region52: #{tpu_custom_call.1} parent=5 // pred_fallthru
        _
    $region6: #{tpu_custom_call.1} parent=1 // loop_footer
      %s28 = sadd.s32 1, %s24
    $region7: #{tpu_custom_call.1} parent=1 // loop_footer_branch
      %23 = sbr.rel target = $region3
    $region8: #{tpu_custom_call.1} parent=1 // loop_exit
      _
    %427 = vsyncpa [#allocation5], 1
    %s428 = scalar_lea.sflag [#allocation5], 1
    %429 = vsyncpa %s428, 1
    %430 = vsyncpa [#allocation6], 1
    %s431 = scalar_lea.sflag [#allocation6], 1
    %432 = vsyncpa %s431, 1

</llo_original>
